<compile_context>
chip_gen: v7x
topology: tpu7x:2x2x1
jax: 0.10.0
libtpu: 0.0.40
codegen_flags: <defaults>
</compile_context>

<pallas_src>
import functools

import jax
import jax.numpy as jnp
from jax import lax
from jax.experimental import pallas as pl
from jax.experimental.pallas import tpu as pltpu

LANE = 128
SUBLANE = 8


def _round_up(x, m):
    return ((x + m - 1) // m) * m


def fasttext_kernel(text_ref, emb_ref, w_ref, b_ref, out_ref, *, seq_len):
    # text_ref : VMEM [tile_b, S]      int32 (per-grid-step batch tile of token ids)
    # emb_ref  : VMEM [V_pad, D_pad]   f32   (full lane-padded embedding table)
    # w_ref    : VMEM [D_pad, O_pad]   f32   (fc weight, already transposed)
    # b_ref    : VMEM [1, O_pad]       f32
    # out_ref  : VMEM [tile_b, O_pad]  f32
    tile_b = out_ref.shape[0]
    v_pad = emb_ref.shape[0]

    ids = text_ref[...]                                        # [tile_b, S] int32
    iota_v = lax.broadcasted_iota(jnp.int32, (tile_b, v_pad), 1)

    # counts[b, v] = number of occurrences of token v in batch row b.
    # seq_len is a static Python int: fully unrolled compare+add chain (pure VPU,
    # full (8,128) vreg occupancy, S independent ops for the LLO scheduler).
    counts = jnp.zeros((tile_b, v_pad), jnp.float32)
    for s in range(seq_len):
        tok = ids[:, s:s + 1]                                  # [tile_b, 1]
        counts = counts + jnp.where(tok == iota_v, 1.0, 0.0)   # [tile_b, V_pad]

    # Pooling as a matmul: sum of gathered embedding rows == counts @ table.
    pooled_sum = jnp.dot(counts, emb_ref[...],
                         preferred_element_type=jnp.float32)   # [tile_b, D_pad]
    logits = jnp.dot(pooled_sum, w_ref[...],
                     preferred_element_type=jnp.float32)       # [tile_b, O_pad]
    # Apply the 1/S mean scale on the small [tile_b, O_pad] result, then bias.
    out_ref[...] = logits * jnp.float32(1.0 / seq_len) + b_ref[...]


def fasttext_forward(text, emb_table, fc_weight, fc_bias, *, tile_b=128):
    """text: [S, B] int; emb_table: [V, D]; fc_weight: [O, D] (torch layout); fc_bias: [O]."""
    seq_len, batch = text.shape
    vocab, emb_dim = emb_table.shape
    out_dim = fc_bias.shape[0]

    d_pad = _round_up(emb_dim, LANE)
    o_pad = _round_up(out_dim, LANE)
    v_pad = _round_up(vocab, LANE)

    # tile_b: multiple of 8, no larger than the (sublane-rounded) batch.
    tile_b = _round_up(max(int(tile_b), 1), SUBLANE)
    tile_b = min(tile_b, _round_up(batch, SUBLANE))
    b_pad = _round_up(batch, tile_b)

    # Lane-pad parameters with zeros (padded V rows / D rows-cols contribute
    # nothing; padded O columns are sliced off below).
    emb_p = jnp.zeros((v_pad, d_pad), jnp.float32).at[:vocab, :emb_dim].set(
        emb_table.astype(jnp.float32))
    w_p = jnp.zeros((d_pad, o_pad), jnp.float32).at[:emb_dim, :out_dim].set(
        fc_weight.T.astype(jnp.float32))
    bias_p = jnp.zeros((1, o_pad), jnp.float32).at[0, :out_dim].set(
        fc_bias.astype(jnp.float32))

    # Token ids laid out [B_pad, S] so the grid tiles the batch (row) axis.
    # Padded batch rows hold token 0 (valid row); their outputs are sliced off.
    text_p = jnp.zeros((b_pad, seq_len), jnp.int32).at[:batch, :].set(
        text.T.astype(jnp.int32))

    grid = (b_pad // tile_b,)
    kernel = functools.partial(fasttext_kernel, seq_len=seq_len)

    # Real HBM traffic only: text + one-time table/weight/bias fetch + output.
    cost = pl.CostEstimate(
        flops=2 * b_pad * v_pad * d_pad + 2 * b_pad * d_pad * o_pad,
        transcendentals=0,
        bytes_accessed=4 * (b_pad * seq_len + v_pad * d_pad
                            + d_pad * o_pad + o_pad + b_pad * o_pad),
    )

    # VMEM budget: single-buffered params + double-buffered text/out blocks
    # + in-kernel temporaries, with 2x headroom; capped for v5e/v6e (128 MiB).
    # TODO(synk): re-derive the cap for v7x's 64 MiB/TC and switch to the HBM
    # DMA-gather path at a ~2x smaller vocab threshold there.
    resident = 4 * (v_pad * d_pad + d_pad * o_pad + o_pad)
    per_step = 2 * 4 * (tile_b * seq_len + tile_b * o_pad)
    temps = 4 * (tile_b * v_pad + tile_b * d_pad)
    vmem_limit = min(max(2 * (resident + per_step + temps), 32 * 1024 * 1024),
                     96 * 1024 * 1024)

    out_padded = pl.pallas_call(
        kernel,
        out_shape=jax.ShapeDtypeStruct((b_pad, o_pad), jnp.float32),
        grid=grid,
        in_specs=[
            # Per-grid-step batch tile of token ids.
            pl.BlockSpec((tile_b, seq_len), lambda i: (i, 0)),
            # Grid-invariant blocks: fetched once, single-buffered.
            pl.BlockSpec((v_pad, d_pad), lambda i: (0, 0),
                         pipeline_mode=pl.Buffered(1)),
            pl.BlockSpec((d_pad, o_pad), lambda i: (0, 0),
                         pipeline_mode=pl.Buffered(1)),
            pl.BlockSpec((1, o_pad), lambda i: (0, 0),
                         pipeline_mode=pl.Buffered(1)),
        ],
        out_specs=pl.BlockSpec((tile_b, o_pad), lambda i: (i, 0)),
        compiler_params=pltpu.CompilerParams(
            dimension_semantics=("parallel",),
            vmem_limit_bytes=vmem_limit,
        ),
        cost_estimate=cost,
    )(text_p, emb_p, w_p, bias_p)

    return out_padded[:batch, :out_dim]


if __name__ == "__main__":
    # Small, deterministic configuration consistent with the module.
    vocab_size = 50
    embedding_dim = 32
    output_dim = 4
    pad_idx = 0
    seq_len = 12
    batch = 24          # not a multiple of tile_b -> exercises batch padding

    key = jax.random.PRNGKey(0)
    k_emb, k_w, k_b, k_txt = jax.random.split(key, 4)

    emb_table = jax.random.normal(k_emb, (vocab_size, embedding_dim), dtype=jnp.float32)
    emb_table = emb_table.at[pad_idx].set(0.0)   # nn.Embedding(padding_idx=...)
    fc_weight = jax.random.normal(k_w, (output_dim, embedding_dim), dtype=jnp.float32) * 0.1
    fc_bias = jax.random.normal(k_b, (output_dim,), dtype=jnp.float32) * 0.1

    # text: [seq_len, batch] integer token ids (torchtext convention).
    text = jax.random.randint(k_txt, (seq_len, batch), 0, vocab_size, dtype=jnp.int32)

    # tile_b=16 -> grid of 2 steps (exercises the batch-tiled, padded path).
    out = fasttext_forward(text, emb_table, fc_weight, fc_bias, tile_b=16)
    out = jax.block_until_ready(out)

    # Plain-JAX reference (identical math to the PyTorch module).
    ref_emb = jnp.transpose(jnp.take(emb_table, text, axis=0), (1, 0, 2))   # [B, S, D]
    ref = jnp.mean(ref_emb, axis=1) @ fc_weight.T + fc_bias

    assert out.shape == (batch, output_dim)
    assert jnp.allclose(out, ref, atol=1e-4, rtol=1e-4), float(jnp.max(jnp.abs(out - ref)))

    print("KERNEL_OK")
</pallas_src>

<mosaic_0001>
module attributes {stable_mosaic.version = 11 : i64} {
  func.func @fasttext_kernel(%arg0: i32, %arg1: memref<16x12xi32, #tpu.memory_space<vmem>>, %arg2: memref<128x128xf32, #tpu.memory_space<vmem>>, %arg3: memref<128x128xf32, #tpu.memory_space<vmem>>, %arg4: memref<1x128xf32, #tpu.memory_space<vmem>>, %arg5: memref<16x128xf32, #tpu.memory_space<vmem>>) attributes {dimension_semantics = [#tpu.dimension_semantics<parallel>], iteration_bounds = array<i64: 2>, scalar_prefetch = 0 : i64, scratch_operands = 0 : i64, tpu.core_type = #tpu.core_type<tc>, window_params = [{transform_indices = @transform_0, window_bounds = array<i64: 16, 12>}, {pipeline_mode = #tpu.pipeline_mode<synchronous>, transform_indices = @transform_1, window_bounds = array<i64: 128, 128>}, {pipeline_mode = #tpu.pipeline_mode<synchronous>, transform_indices = @transform_2, window_bounds = array<i64: 128, 128>}, {pipeline_mode = #tpu.pipeline_mode<synchronous>, transform_indices = @transform_3, window_bounds = array<i64: 1, 128>}, {transform_indices = @transform_4, window_bounds = array<i64: 16, 128>}]} {
    %c0 = arith.constant 0 : index
    %c0_0 = arith.constant 0 : index
    %0 = vector.load %arg1[%c0, %c0_0] : memref<16x12xi32, #tpu.memory_space<vmem>>, vector<16x12xi32>
    %1 = tpu.iota {dimensions = array<i32: 1>} : vector<16x128xi32>
    %cst = arith.constant 0.000000e+00 : f32
    %2 = vector.broadcast %cst : f32 to vector<16x128xf32>
    %3 = vector.extract_strided_slice %0 {offsets = [0, 0], sizes = [16, 1], strides = [1, 1]} : vector<16x12xi32> to vector<16x1xi32>
    %4 = vector.broadcast %3 : vector<16x1xi32> to vector<16x128xi32>
    %5 = arith.cmpi eq, %4, %1 : vector<16x128xi32>
    %cst_1 = arith.constant 1.000000e+00 : f32
    %cst_2 = arith.constant 0.000000e+00 : f32
    %6 = vector.broadcast %cst_1 : f32 to vector<16x128xf32>
    %7 = vector.broadcast %cst_2 : f32 to vector<16x128xf32>
    %8 = arith.select %5, %6, %7 : vector<16x128xi1>, vector<16x128xf32>
    %9 = arith.addf %2, %8 : vector<16x128xf32>
    %10 = vector.extract_strided_slice %0 {offsets = [0, 1], sizes = [16, 1], strides = [1, 1]} : vector<16x12xi32> to vector<16x1xi32>
    %11 = vector.broadcast %10 : vector<16x1xi32> to vector<16x128xi32>
    %12 = arith.cmpi eq, %11, %1 : vector<16x128xi32>
    %cst_3 = arith.constant 1.000000e+00 : f32
    %cst_4 = arith.constant 0.000000e+00 : f32
    %13 = vector.broadcast %cst_3 : f32 to vector<16x128xf32>
    %14 = vector.broadcast %cst_4 : f32 to vector<16x128xf32>
    %15 = arith.select %12, %13, %14 : vector<16x128xi1>, vector<16x128xf32>
    %16 = arith.addf %9, %15 : vector<16x128xf32>
    %17 = vector.extract_strided_slice %0 {offsets = [0, 2], sizes = [16, 1], strides = [1, 1]} : vector<16x12xi32> to vector<16x1xi32>
    %18 = vector.broadcast %17 : vector<16x1xi32> to vector<16x128xi32>
    %19 = arith.cmpi eq, %18, %1 : vector<16x128xi32>
    %cst_5 = arith.constant 1.000000e+00 : f32
    %cst_6 = arith.constant 0.000000e+00 : f32
    %20 = vector.broadcast %cst_5 : f32 to vector<16x128xf32>
    %21 = vector.broadcast %cst_6 : f32 to vector<16x128xf32>
    %22 = arith.select %19, %20, %21 : vector<16x128xi1>, vector<16x128xf32>
    %23 = arith.addf %16, %22 : vector<16x128xf32>
    %24 = vector.extract_strided_slice %0 {offsets = [0, 3], sizes = [16, 1], strides = [1, 1]} : vector<16x12xi32> to vector<16x1xi32>
    %25 = vector.broadcast %24 : vector<16x1xi32> to vector<16x128xi32>
    %26 = arith.cmpi eq, %25, %1 : vector<16x128xi32>
    %cst_7 = arith.constant 1.000000e+00 : f32
    %cst_8 = arith.constant 0.000000e+00 : f32
    %27 = vector.broadcast %cst_7 : f32 to vector<16x128xf32>
    %28 = vector.broadcast %cst_8 : f32 to vector<16x128xf32>
    %29 = arith.select %26, %27, %28 : vector<16x128xi1>, vector<16x128xf32>
    %30 = arith.addf %23, %29 : vector<16x128xf32>
    %31 = vector.extract_strided_slice %0 {offsets = [0, 4], sizes = [16, 1], strides = [1, 1]} : vector<16x12xi32> to vector<16x1xi32>
    %32 = vector.broadcast %31 : vector<16x1xi32> to vector<16x128xi32>
    %33 = arith.cmpi eq, %32, %1 : vector<16x128xi32>
    %cst_9 = arith.constant 1.000000e+00 : f32
    %cst_10 = arith.constant 0.000000e+00 : f32
    %34 = vector.broadcast %cst_9 : f32 to vector<16x128xf32>
    %35 = vector.broadcast %cst_10 : f32 to vector<16x128xf32>
    %36 = arith.select %33, %34, %35 : vector<16x128xi1>, vector<16x128xf32>
    %37 = arith.addf %30, %36 : vector<16x128xf32>
    %38 = vector.extract_strided_slice %0 {offsets = [0, 5], sizes = [16, 1], strides = [1, 1]} : vector<16x12xi32> to vector<16x1xi32>
    %39 = vector.broadcast %38 : vector<16x1xi32> to vector<16x128xi32>
    %40 = arith.cmpi eq, %39, %1 : vector<16x128xi32>
    %cst_11 = arith.constant 1.000000e+00 : f32
    %cst_12 = arith.constant 0.000000e+00 : f32
    %41 = vector.broadcast %cst_11 : f32 to vector<16x128xf32>
    %42 = vector.broadcast %cst_12 : f32 to vector<16x128xf32>
    %43 = arith.select %40, %41, %42 : vector<16x128xi1>, vector<16x128xf32>
    %44 = arith.addf %37, %43 : vector<16x128xf32>
    %45 = vector.extract_strided_slice %0 {offsets = [0, 6], sizes = [16, 1], strides = [1, 1]} : vector<16x12xi32> to vector<16x1xi32>
    %46 = vector.broadcast %45 : vector<16x1xi32> to vector<16x128xi32>
    %47 = arith.cmpi eq, %46, %1 : vector<16x128xi32>
    %cst_13 = arith.constant 1.000000e+00 : f32
    %cst_14 = arith.constant 0.000000e+00 : f32
    %48 = vector.broadcast %cst_13 : f32 to vector<16x128xf32>
    %49 = vector.broadcast %cst_14 : f32 to vector<16x128xf32>
    %50 = arith.select %47, %48, %49 : vector<16x128xi1>, vector<16x128xf32>
    %51 = arith.addf %44, %50 : vector<16x128xf32>
    %52 = vector.extract_strided_slice %0 {offsets = [0, 7], sizes = [16, 1], strides = [1, 1]} : vector<16x12xi32> to vector<16x1xi32>
    %53 = vector.broadcast %52 : vector<16x1xi32> to vector<16x128xi32>
    %54 = arith.cmpi eq, %53, %1 : vector<16x128xi32>
    %cst_15 = arith.constant 1.000000e+00 : f32
    %cst_16 = arith.constant 0.000000e+00 : f32
    %55 = vector.broadcast %cst_15 : f32 to vector<16x128xf32>
    %56 = vector.broadcast %cst_16 : f32 to vector<16x128xf32>
    %57 = arith.select %54, %55, %56 : vector<16x128xi1>, vector<16x128xf32>
    %58 = arith.addf %51, %57 : vector<16x128xf32>
    %59 = vector.extract_strided_slice %0 {offsets = [0, 8], sizes = [16, 1], strides = [1, 1]} : vector<16x12xi32> to vector<16x1xi32>
    %60 = vector.broadcast %59 : vector<16x1xi32> to vector<16x128xi32>
    %61 = arith.cmpi eq, %60, %1 : vector<16x128xi32>
    %cst_17 = arith.constant 1.000000e+00 : f32
    %cst_18 = arith.constant 0.000000e+00 : f32
    %62 = vector.broadcast %cst_17 : f32 to vector<16x128xf32>
    %63 = vector.broadcast %cst_18 : f32 to vector<16x128xf32>
    %64 = arith.select %61, %62, %63 : vector<16x128xi1>, vector<16x128xf32>
    %65 = arith.addf %58, %64 : vector<16x128xf32>
    %66 = vector.extract_strided_slice %0 {offsets = [0, 9], sizes = [16, 1], strides = [1, 1]} : vector<16x12xi32> to vector<16x1xi32>
    %67 = vector.broadcast %66 : vector<16x1xi32> to vector<16x128xi32>
    %68 = arith.cmpi eq, %67, %1 : vector<16x128xi32>
    %cst_19 = arith.constant 1.000000e+00 : f32
    %cst_20 = arith.constant 0.000000e+00 : f32
    %69 = vector.broadcast %cst_19 : f32 to vector<16x128xf32>
    %70 = vector.broadcast %cst_20 : f32 to vector<16x128xf32>
    %71 = arith.select %68, %69, %70 : vector<16x128xi1>, vector<16x128xf32>
    %72 = arith.addf %65, %71 : vector<16x128xf32>
    %73 = vector.extract_strided_slice %0 {offsets = [0, 10], sizes = [16, 1], strides = [1, 1]} : vector<16x12xi32> to vector<16x1xi32>
    %74 = vector.broadcast %73 : vector<16x1xi32> to vector<16x128xi32>
    %75 = arith.cmpi eq, %74, %1 : vector<16x128xi32>
    %cst_21 = arith.constant 1.000000e+00 : f32
    %cst_22 = arith.constant 0.000000e+00 : f32
    %76 = vector.broadcast %cst_21 : f32 to vector<16x128xf32>
    %77 = vector.broadcast %cst_22 : f32 to vector<16x128xf32>
    %78 = arith.select %75, %76, %77 : vector<16x128xi1>, vector<16x128xf32>
    %79 = arith.addf %72, %78 : vector<16x128xf32>
    %80 = vector.extract_strided_slice %0 {offsets = [0, 11], sizes = [16, 1], strides = [1, 1]} : vector<16x12xi32> to vector<16x1xi32>
    %81 = vector.broadcast %80 : vector<16x1xi32> to vector<16x128xi32>
    %82 = arith.cmpi eq, %81, %1 : vector<16x128xi32>
    %cst_23 = arith.constant 1.000000e+00 : f32
    %cst_24 = arith.constant 0.000000e+00 : f32
    %83 = vector.broadcast %cst_23 : f32 to vector<16x128xf32>
    %84 = vector.broadcast %cst_24 : f32 to vector<16x128xf32>
    %85 = arith.select %82, %83, %84 : vector<16x128xi1>, vector<16x128xf32>
    %86 = arith.addf %79, %85 : vector<16x128xf32>
    %c0_25 = arith.constant 0 : index
    %c0_26 = arith.constant 0 : index
    %87 = vector.load %arg2[%c0_25, %c0_26] : memref<128x128xf32, #tpu.memory_space<vmem>>, vector<128x128xf32>
    %cst_27 = arith.constant dense<0.000000e+00> : vector<16x128xf32>
    %88 = tpu.matmul %86, %87, %cst_27 {dimension_numbers = #tpu.dot_dimension_numbers<[1], [0], [0], [1], [0, 0, 1, 1], [], []>} : vector<16x128xf32>, vector<128x128xf32>, vector<16x128xf32> -> vector<16x128xf32>
    %c0_28 = arith.constant 0 : index
    %c0_29 = arith.constant 0 : index
    %89 = vector.load %arg3[%c0_28, %c0_29] : memref<128x128xf32, #tpu.memory_space<vmem>>, vector<128x128xf32>
    %cst_30 = arith.constant dense<0.000000e+00> : vector<16x128xf32>
    %90 = tpu.matmul %88, %89, %cst_30 {dimension_numbers = #tpu.dot_dimension_numbers<[1], [0], [0], [1], [0, 0, 1, 1], [], []>} : vector<16x128xf32>, vector<128x128xf32>, vector<16x128xf32> -> vector<16x128xf32>
    %cst_31 = arith.constant 0.0833333358 : f32
    %91 = vector.broadcast %cst_31 : f32 to vector<16x128xf32>
    %92 = arith.mulf %90, %91 : vector<16x128xf32>
    %c0_32 = arith.constant 0 : index
    %c0_33 = arith.constant 0 : index
    %93 = vector.load %arg4[%c0_32, %c0_33] : memref<1x128xf32, #tpu.memory_space<vmem>>, vector<1x128xf32>
    %94 = vector.broadcast %93 : vector<1x128xf32> to vector<16x128xf32>
    %95 = arith.addf %92, %94 : vector<16x128xf32>
    %c0_34 = arith.constant 0 : index
    %c0_35 = arith.constant 0 : index
    %96 = vector.load %arg5[%c0_34, %c0_35] : memref<16x128xf32, #tpu.memory_space<vmem>>, vector<16x128xf32>
    tpu.vector_store %arg5[%c0_34, %c0_35], %95 {strides = array<i32>} : memref<16x128xf32, #tpu.memory_space<vmem>>, vector<16x128xf32>,
    return
  }
  func.func @transform_0(%arg0: i32) -> (i32, i32) {
    %c0_i32 = arith.constant 0 : i32
    %c0_i32_0 = arith.constant 0 : i32
    return %arg0, %c0_i32 : i32, i32
  }
  func.func @transform_1(%arg0: i32) -> (i32, i32) {
    %c0_i32 = arith.constant 0 : i32
    %c0_i32_0 = arith.constant 0 : i32
    %c0_i32_1 = arith.constant 0 : i32
    return %c0_i32, %c0_i32_0 : i32, i32
  }
  func.func @transform_2(%arg0: i32) -> (i32, i32) {
    %c0_i32 = arith.constant 0 : i32
    %c0_i32_0 = arith.constant 0 : i32
    %c0_i32_1 = arith.constant 0 : i32
    return %c0_i32, %c0_i32_0 : i32, i32
  }
  func.func @transform_3(%arg0: i32) -> (i32, i32) {
    %c0_i32 = arith.constant 0 : i32
    %c0_i32_0 = arith.constant 0 : i32
    %c0_i32_1 = arith.constant 0 : i32
    return %c0_i32, %c0_i32_0 : i32, i32
  }
  func.func @transform_4(%arg0: i32) -> (i32, i32) {
    %c0_i32 = arith.constant 0 : i32
    %c0_i32_0 = arith.constant 0 : i32
    return %arg0, %c0_i32 : i32, i32
  }
}

</mosaic_0001>

<llo_original>
// kernel: tpu_custom_call.1
$region0: #{tpu_custom_call.1}
  #allocation0 [shape = 'u32[]', space=smem, size = 0x4, offset = 0x4, fixed_abs, tag = 'smem constant byte address 0x4 - core index']
  #allocation1 [shape = 'u32[144,128]{1,0:T(1,128)}', space=vmem, size = 0x12000, scoped, tag = 'internal scratch']
  %s0 = inlined_call_operand.vmem [shape: s32[32,12], index: 0, kind: input, shape index: {}]
  %s1 = inlined_call_operand.hbm [shape: f32[128,128], index: 1, kind: input, shape index: {}]
  %s2 = inlined_call_operand.hbm [shape: f32[128,128], index: 2, kind: input, shape index: {}]
  %s3 = inlined_call_operand.vmem [shape: f32[1,128], index: 3, kind: input, shape index: {}]
  %s4 = inlined_call_operand.hbm [shape: f32[32,128], index: 4, kind: output, shape index: {}]
  %s5 = sld [smem:[#allocation0]]
  $region57: #{tpu_custom_call.1} parent=0
    _
  %s7 = ssub.s32 1, %s5
  %s8 = scalar_select 0, %s7, %s5
  $region1: #{tpu_custom_call.1} parent=0
    #allocation2 [shape = 'u8[65536]{0}', space=vmem, size = 0x10000, scoped, tag = 'input window, operand 1, single buffered']
    #allocation3 [shape = 's32[2]{0}', space=sflag, size = 0x8, scoped, tag = 'scoped memory for tpu_custom_call.1']
    #allocation4 [shape = 's32[2]{0}', space=sflag, size = 0x8, scoped, tag = 'scoped memory for tpu_custom_call.1']
    #allocation5 [shape = 'u8[65536]{0}', space=vmem, size = 0x10000, scoped, tag = 'input window, operand 2, single buffered']
    #allocation6 [shape = 's32[1]{0}', space=sflag, size = 0x4, scoped, tag = 'scoped memory for tpu_custom_call.1']
    #allocation7 [shape = 'u8[16384]{0}', space=vmem, size = 0x4000, scoped, tag = 'output window, operand 0']
    %9 = vsyncpa [#allocation3], 0
    %10 = vsyncpa [#allocation6], 0
    %11 = vsyncpa [#allocation4], 0
    %s12 = scalar_lea.sflag [#allocation4], 1
    %13 = vsyncpa %s12, 0
    loop: start=0, step=1, limit=4
    $region2: #{tpu_custom_call.1} parent=1 // loop_pre_header
      _
    $region3: #{tpu_custom_call.1} parent=1 // loop_header
      %s15 = sphi 0, %s19
      %p16 = scmp.ge.s32.totalorder %s15, 4
      %s25 = sphi 0, %s27
      %s28 = sphi 0, %s25
      %s29 = sphi 0, %s28
      %s45 = sphi 0, %s29
      %s49 = sphi 0, %s49
      %s51 = sphi 0, %s49
      %s52 = sphi 0, %s51
      %s66 = sphi 0, %s52
      %s70 = sphi 0, %s70
      %s72 = sphi 0, %s70
      %s73 = sphi 0, %s72
      %s87 = sphi 0, %s73
      %s91 = sphi 0, %s91
      %s93 = sphi 0, %s91
      %s94 = sphi 0, %s93
      %s108 = sphi 0, %s94
      %s114 = sphi 0, %s116
      %s117 = sphi 0, %s114
      %s118 = sphi 0, %s117
      %s134 = sphi 0, %s118
    $region4: #{tpu_custom_call.1} parent=1 // loop_header_branch
      %18 = sbr.rel (%p16) target = $region8
    $region5: #{tpu_custom_call.1} parent=1 // loop_body
      %s20 = ssub.s32 %s15, 1
      %s21 = ssub.s32 %s15, 2
      %s22 = sadd.s32 %s15, 1
      %s23 = ssub.s32 %s15, %s22
      %p24 = scmp.eq.s32.totalorder %s23, 0
      %s26 = sadd.s32 %s25, 1
      %s27 = scalar_select %p24, %s25, %s26
      %p30 = pneg %p24
      %p31 = scmp.eq.s32.totalorder %s15, 1
      %p32 = por %p30, %p31
      %p33 = scmp.ne.s32.totalorder %s25, %s28
      %p34 = scmp.eq.s32.totalorder %s15, 0
      %p35 = por %p33, %p34
      %p36 = scmp.ne.s32.totalorder %s25, %s28
      %p37 = scmp.eq.s32.totalorder %s20, 1
      %p38 = por %p36, %p37
      %p39 = scmp.ne.s32.totalorder %s28, %s29
      %p40 = scmp.eq.s32.totalorder %s20, 0
      %p41 = por %p39, %p40
      %p42 = scmp.ne.s32.totalorder %s28, %s29
      %p43 = scmp.eq.s32.totalorder %s21, 1
      %p44 = por %p42, %p43
      %p46 = scmp.ne.s32.totalorder %s29, %s45
      %p47 = scmp.eq.s32.totalorder %s21, 0
      %p48 = por %p46, %p47
      %s50 = sadd.s32 %s49, 1
      %p53 = scmp.eq.s32.totalorder %s15, 1
      %p54 = scmp.ne.s32.totalorder %s49, %s51
      %p55 = scmp.eq.s32.totalorder %s15, 0
      %p56 = por %p54, %p55
      %p57 = scmp.ne.s32.totalorder %s49, %s51
      %p58 = scmp.eq.s32.totalorder %s20, 1
      %p59 = por %p57, %p58
      %p60 = scmp.ne.s32.totalorder %s51, %s52
      %p61 = scmp.eq.s32.totalorder %s20, 0
      %p62 = por %p60, %p61
      %p63 = scmp.ne.s32.totalorder %s51, %s52
      %p64 = scmp.eq.s32.totalorder %s21, 1
      %p65 = por %p63, %p64
      %p67 = scmp.ne.s32.totalorder %s52, %s66
      %p68 = scmp.eq.s32.totalorder %s21, 0
      %p69 = por %p67, %p68
      %s71 = sadd.s32 %s70, 1
      %p74 = scmp.eq.s32.totalorder %s15, 1
      %p75 = scmp.ne.s32.totalorder %s70, %s72
      %p76 = scmp.eq.s32.totalorder %s15, 0
      %p77 = por %p75, %p76
      %p78 = scmp.ne.s32.totalorder %s70, %s72
      %p79 = scmp.eq.s32.totalorder %s20, 1
      %p80 = por %p78, %p79
      %p81 = scmp.ne.s32.totalorder %s72, %s73
      %p82 = scmp.eq.s32.totalorder %s20, 0
      %p83 = por %p81, %p82
      %p84 = scmp.ne.s32.totalorder %s72, %s73
      %p85 = scmp.eq.s32.totalorder %s21, 1
      %p86 = por %p84, %p85
      %p88 = scmp.ne.s32.totalorder %s73, %s87
      %p89 = scmp.eq.s32.totalorder %s21, 0
      %p90 = por %p88, %p89
      %s92 = sadd.s32 %s91, 1
      %p95 = scmp.eq.s32.totalorder %s15, 1
      %p96 = scmp.ne.s32.totalorder %s91, %s93
      %p97 = scmp.eq.s32.totalorder %s15, 0
      %p98 = por %p96, %p97
      %p99 = scmp.ne.s32.totalorder %s91, %s93
      %p100 = scmp.eq.s32.totalorder %s20, 1
      %p101 = por %p99, %p100
      %p102 = scmp.ne.s32.totalorder %s93, %s94
      %p103 = scmp.eq.s32.totalorder %s20, 0
      %p104 = por %p102, %p103
      %p105 = scmp.ne.s32.totalorder %s93, %s94
      %p106 = scmp.eq.s32.totalorder %s21, 1
      %p107 = por %p105, %p106
      %p109 = scmp.ne.s32.totalorder %s94, %s108
      %p110 = scmp.eq.s32.totalorder %s21, 0
      %p111 = por %p109, %p110
      %s112 = ssub.s32 %s15, %s22
      %p113 = scmp.eq.s32.totalorder %s112, 0
      %s115 = sadd.s32 %s114, 1
      %s116 = scalar_select %p113, %s114, %s115
      %p119 = pneg %p113
      %p120 = scmp.eq.s32.totalorder %s15, 1
      %p121 = por %p119, %p120
      %p122 = scmp.ne.s32.totalorder %s114, %s117
      %p123 = scmp.eq.s32.totalorder %s15, 0
      %p124 = por %p122, %p123
      %p125 = scmp.ne.s32.totalorder %s114, %s117
      %p126 = scmp.eq.s32.totalorder %s20, 1
      %p127 = por %p125, %p126
      %p128 = scmp.ne.s32.totalorder %s117, %s118
      %p129 = scmp.eq.s32.totalorder %s20, 0
      %p130 = por %p128, %p129
      %p131 = scmp.ne.s32.totalorder %s117, %s118
      %p132 = scmp.eq.s32.totalorder %s21, 1
      %p133 = por %p131, %p132
      %p135 = scmp.ne.s32.totalorder %s118, %s134
      %p136 = scmp.eq.s32.totalorder %s21, 0
      %p137 = por %p135, %p136
      %p138 = scmp.le.s32.totalorder 1, %s15
      %p139 = scmp.lt.s32.totalorder %s15, 3
      %p140 = pnand %p138, %p139
      %p141 = pneg %p140
      // Predicated region
      $region9: #{tpu_custom_call.1} parent=5 // pred_check
        _
      $region10: #{tpu_custom_call.1} parent=5 // pred_check_branch
        %143 = sbr.rel (%p140) target = $region12
      $region11: #{tpu_custom_call.1} parent=5 // pred_region
        %s144 = ssub.s32 %s15, 1
        // Predicated region
        $region13: #{tpu_custom_call.1} parent=11 // pred_check
          %p145 = pneg %p62
        $region14: #{tpu_custom_call.1} parent=11 // pred_check_branch
          %147 = sbr.rel (%p145) target = $region16
        $region15: #{tpu_custom_call.1} parent=11 // pred_region
          %s149 = ssub.s32 2048, 2048
          %150 = vsyncadd [#allocation3], %s149
          %s151 = sshll.u32 [#allocation2], 4
          %s152 = int_to_ptr.vmem [resolvable:$true] %s151
          %157 = dma.hbm_to_vmem [thread:$0]  %s1, 2048, %s152, [#allocation3], 128, 128, 8
        $region16: #{tpu_custom_call.1} parent=11 // pred_fallthru
          _
        // Predicated region
        $region17: #{tpu_custom_call.1} parent=11 // pred_check
          %p158 = pneg %p83
        $region18: #{tpu_custom_call.1} parent=11 // pred_check_branch
          %160 = sbr.rel (%p158) target = $region20
        $region19: #{tpu_custom_call.1} parent=11 // pred_region
          %s162 = ssub.s32 2048, 2048
          %163 = vsyncadd [#allocation6], %s162
          %s164 = sshll.u32 [#allocation5], 4
          %s165 = int_to_ptr.vmem [resolvable:$true] %s164
          %170 = dma.hbm_to_vmem [thread:$0]  %s2, 2048, %s165, [#allocation6], 128, 128, 8
        $region20: #{tpu_custom_call.1} parent=11 // pred_fallthru
          _
        // Predicated region
        $region21: #{tpu_custom_call.1} parent=11 // pred_check
          %p171 = pneg %p104
        $region22: #{tpu_custom_call.1} parent=11 // pred_check_branch
          %173 = sbr.rel (%p171) target = $region24
        $region23: #{tpu_custom_call.1} parent=11 // pred_region
          _
        $region24: #{tpu_custom_call.1} parent=11 // pred_fallthru
          _
      $region12: #{tpu_custom_call.1} parent=5 // pred_fallthru
        _
      %p174 = scmp.lt.s32.totalorder %s15, 2
      // Predicated region
      $region25: #{tpu_custom_call.1} parent=5 // pred_check
        %p175 = pneg %p174
      $region26: #{tpu_custom_call.1} parent=5 // pred_check_branch
        %177 = sbr.rel (%p175) target = $region28
      $region27: #{tpu_custom_call.1} parent=5 // pred_region
        // Predicated region
        $region29: #{tpu_custom_call.1} parent=27 // pred_check
          %p178 = pneg %p35
        $region30: #{tpu_custom_call.1} parent=27 // pred_check_branch
          %180 = sbr.rel (%p178) target = $region32
        $region31: #{tpu_custom_call.1} parent=27 // pred_region
          %s181 = smul.u32 2, %s15
          %p182 = scmp.lt.s32.totalorder %s181, 3
          %s183 = scalar_select %p182, %s181, 3
          %s184 = smul.addr %s183, 8
          %s185 = scalar_lea.vmem %s0, %s184
          %s186 = smul.u32 2, %s15
        $region32: #{tpu_custom_call.1} parent=27 // pred_fallthru
          _
      $region28: #{tpu_custom_call.1} parent=5 // pred_fallthru
        _
      %p187 = scmp.le.s32.totalorder 1, %s15
      %p188 = scmp.lt.s32.totalorder %s15, 3
      %p189 = pnand %p187, %p188
      %p190 = pneg %p189
      // Predicated region
      $region33: #{tpu_custom_call.1} parent=5 // pred_check
        _
      $region34: #{tpu_custom_call.1} parent=5 // pred_check_branch
        %192 = sbr.rel (%p189) target = $region36
      $region35: #{tpu_custom_call.1} parent=5 // pred_region
        %s193 = ssub.s32 %s15, 1
        // Predicated region
        $region37: #{tpu_custom_call.1} parent=35 // pred_check
          %p194 = pneg %p62
        $region38: #{tpu_custom_call.1} parent=35 // pred_check_branch
          %196 = sbr.rel (%p194) target = $region40
        $region39: #{tpu_custom_call.1} parent=35 // pred_region
          %197 = dma.done [#allocation3], 2048
        $region40: #{tpu_custom_call.1} parent=35 // pred_fallthru
          _
        // Predicated region
        $region41: #{tpu_custom_call.1} parent=35 // pred_check
          %p198 = pneg %p83
        $region42: #{tpu_custom_call.1} parent=35 // pred_check_branch
          %200 = sbr.rel (%p198) target = $region44
        $region43: #{tpu_custom_call.1} parent=35 // pred_region
          %201 = dma.done [#allocation6], 2048
        $region44: #{tpu_custom_call.1} parent=35 // pred_fallthru
          _
        %s202 = smul.u32 2, %s20
        %p203 = scmp.lt.s32.totalorder %s202, 3
        %s204 = scalar_select %p203, %s202, 3
        %s205 = smul.addr %s204, 8
        %s206 = scalar_lea.vmem %s0, %s205
        %p207 = pneg %p41
        %p208 = pneg %p38
        %p209 = pneg %p62
        %p210 = pneg %p59
        %p211 = pneg %p83
        %p212 = pneg %p80
        %p213 = pneg %p104
        %p214 = pneg %p101
        %p215 = pneg %p130
        %p216 = pneg %p127
        %s217 = sand.u32 %s117, 1
        %s218 = scalar_lea.sflag [#allocation4], %s217
        %s219 = sand.u32 %s117, 1
        %s220 = smul.addr %s219, 16
        %s221 = scalar_lea.vmem [#allocation7], %s220
        %s222 = smul.u32 2, %s20
        %p223 = scmp.lt.s32.totalorder %s222, 3
        %s224 = scalar_select %p223, %s222, 3
        %s225 = smul.addr %s224, 8
        %s226 = scalar_lea.vmem %s0, %s225
        %s227 = smul.u32 2, %s20
        %s228 = smul.u32 2, %s20
        %v229 = vld [vmem:[%s226] sm:$0xff]
        %v230 = vld [vmem:[%s226 + $0x8] sm:$0xff]
        %v231 = vlaneseq
        %v232 = vand.u32 %v231, 127
        %233 = vset.pattern.permute.xlu0 0
        %234 = vperm.xlu0 %233, %v229
        %v235 = vpop.permute.xlu0 %234
        %236 = vset.pattern.permute.xlu0 0
        %237 = vperm.xlu0 %236, %v230
        %v238 = vpop.permute.xlu0 %237
        %vm239 = vcmp.eq.s32.totalorder %v235, %v232
        %vm240 = vcmp.eq.s32.totalorder %v238, %v232
        %v241 = vsel %vm239, 1.0, 0.0
        %v242 = vsel %vm240, 1.0, 0.0
        %v243 = vadd.f32 %v241, 0.0
        %v244 = vadd.f32 %v242, 0.0
        %245 = vset.pattern.permute.xlu0 1
        %246 = vperm.xlu0 %245, %v229
        %v247 = vpop.permute.xlu0 %246
        %248 = vset.pattern.permute.xlu0 1
        %249 = vperm.xlu0 %248, %v230
        %v250 = vpop.permute.xlu0 %249
        %vm251 = vcmp.eq.s32.totalorder %v247, %v232
        %vm252 = vcmp.eq.s32.totalorder %v250, %v232
        %v253 = vsel %vm251, 1.0, 0.0
        %v254 = vsel %vm252, 1.0, 0.0
        %v255 = vadd.f32 %v243, %v253
        %v256 = vadd.f32 %v244, %v254
        %257 = vset.pattern.permute.xlu0 2
        %258 = vperm.xlu0 %257, %v229
        %v259 = vpop.permute.xlu0 %258
        %260 = vset.pattern.permute.xlu0 2
        %261 = vperm.xlu0 %260, %v230
        %v262 = vpop.permute.xlu0 %261
        %vm263 = vcmp.eq.s32.totalorder %v259, %v232
        %vm264 = vcmp.eq.s32.totalorder %v262, %v232
        %v265 = vsel %vm263, 1.0, 0.0
        %v266 = vsel %vm264, 1.0, 0.0
        %v267 = vadd.f32 %v255, %v265
        %v268 = vadd.f32 %v256, %v266
        %269 = vset.pattern.permute.xlu0 3
        %270 = vperm.xlu0 %269, %v229
        %v271 = vpop.permute.xlu0 %270
        %272 = vset.pattern.permute.xlu0 3
        %273 = vperm.xlu0 %272, %v230
        %v274 = vpop.permute.xlu0 %273
        %vm275 = vcmp.eq.s32.totalorder %v271, %v232
        %vm276 = vcmp.eq.s32.totalorder %v274, %v232
        %v277 = vsel %vm275, 1.0, 0.0
        %v278 = vsel %vm276, 1.0, 0.0
        %v279 = vadd.f32 %v267, %v277
        %v280 = vadd.f32 %v268, %v278
        %281 = vset.pattern.permute.xlu0 4
        %282 = vperm.xlu0 %281, %v229
        %v283 = vpop.permute.xlu0 %282
        %284 = vset.pattern.permute.xlu0 4
        %285 = vperm.xlu0 %284, %v230
        %v286 = vpop.permute.xlu0 %285
        %vm287 = vcmp.eq.s32.totalorder %v283, %v232
        %vm288 = vcmp.eq.s32.totalorder %v286, %v232
        %v289 = vsel %vm287, 1.0, 0.0
        %v290 = vsel %vm288, 1.0, 0.0
        %v291 = vadd.f32 %v279, %v289
        %v292 = vadd.f32 %v280, %v290
        %293 = vset.pattern.permute.xlu0 5
        %294 = vperm.xlu0 %293, %v229
        %v295 = vpop.permute.xlu0 %294
        %296 = vset.pattern.permute.xlu0 5
        %297 = vperm.xlu0 %296, %v230
        %v298 = vpop.permute.xlu0 %297
        %vm299 = vcmp.eq.s32.totalorder %v295, %v232
        %vm300 = vcmp.eq.s32.totalorder %v298, %v232
        %v301 = vsel %vm299, 1.0, 0.0
        %v302 = vsel %vm300, 1.0, 0.0
        %v303 = vadd.f32 %v291, %v301
        %v304 = vadd.f32 %v292, %v302
        %305 = vset.pattern.permute.xlu0 6
        %306 = vperm.xlu0 %305, %v229
        %v307 = vpop.permute.xlu0 %306
        %308 = vset.pattern.permute.xlu0 6
        %309 = vperm.xlu0 %308, %v230
        %v310 = vpop.permute.xlu0 %309
        %vm311 = vcmp.eq.s32.totalorder %v307, %v232
        %vm312 = vcmp.eq.s32.totalorder %v310, %v232
        %v313 = vsel %vm311, 1.0, 0.0
        %v314 = vsel %vm312, 1.0, 0.0
        %v315 = vadd.f32 %v303, %v313
        %v316 = vadd.f32 %v304, %v314
        %317 = vset.pattern.permute.xlu0 7
        %318 = vperm.xlu0 %317, %v229
        %v319 = vpop.permute.xlu0 %318
        %320 = vset.pattern.permute.xlu0 7
        %321 = vperm.xlu0 %320, %v230
        %v322 = vpop.permute.xlu0 %321
        %vm323 = vcmp.eq.s32.totalorder %v319, %v232
        %vm324 = vcmp.eq.s32.totalorder %v322, %v232
        %v325 = vsel %vm323, 1.0, 0.0
        %v326 = vsel %vm324, 1.0, 0.0
        %v327 = vadd.f32 %v315, %v325
        %v328 = vadd.f32 %v316, %v326
        %329 = vset.pattern.permute.xlu0 8
        %330 = vperm.xlu0 %329, %v229
        %v331 = vpop.permute.xlu0 %330
        %332 = vset.pattern.permute.xlu0 8
        %333 = vperm.xlu0 %332, %v230
        %v334 = vpop.permute.xlu0 %333
        %vm335 = vcmp.eq.s32.totalorder %v331, %v232
        %vm336 = vcmp.eq.s32.totalorder %v334, %v232
        %v337 = vsel %vm335, 1.0, 0.0
        %v338 = vsel %vm336, 1.0, 0.0
        %v339 = vadd.f32 %v327, %v337
        %v340 = vadd.f32 %v328, %v338
        %341 = vset.pattern.permute.xlu0 9
        %342 = vperm.xlu0 %341, %v229
        %v343 = vpop.permute.xlu0 %342
        %344 = vset.pattern.permute.xlu0 9
        %345 = vperm.xlu0 %344, %v230
        %v346 = vpop.permute.xlu0 %345
        %vm347 = vcmp.eq.s32.totalorder %v343, %v232
        %vm348 = vcmp.eq.s32.totalorder %v346, %v232
        %v349 = vsel %vm347, 1.0, 0.0
        %v350 = vsel %vm348, 1.0, 0.0
        %v351 = vadd.f32 %v339, %v349
        %v352 = vadd.f32 %v340, %v350
        %353 = vset.pattern.permute.xlu0 10
        %354 = vperm.xlu0 %353, %v229
        %v355 = vpop.permute.xlu0 %354
        %356 = vset.pattern.permute.xlu0 10
        %357 = vperm.xlu0 %356, %v230
        %v358 = vpop.permute.xlu0 %357
        %vm359 = vcmp.eq.s32.totalorder %v355, %v232
        %vm360 = vcmp.eq.s32.totalorder %v358, %v232
        %v361 = vsel %vm359, 1.0, 0.0
        %v362 = vsel %vm360, 1.0, 0.0
        %v363 = vadd.f32 %v351, %v361
        %v364 = vadd.f32 %v352, %v362
        %365 = vset.pattern.permute.xlu0 11
        %366 = vperm.xlu0 %365, %v229
        %v367 = vpop.permute.xlu0 %366
        %368 = vset.pattern.permute.xlu0 11
        %369 = vperm.xlu0 %368, %v230
        %v370 = vpop.permute.xlu0 %369
        %vm371 = vcmp.eq.s32.totalorder %v367, %v232
        %vm372 = vcmp.eq.s32.totalorder %v370, %v232
        %v373 = vsel %vm371, 1.0, 0.0
        %v374 = vsel %vm372, 1.0, 0.0
        %v375 = vadd.f32 %v363, %v373
        %v376 = vadd.f32 %v364, %v374
        %v377 = vld [vmem:[#allocation2] sm:$0xff]
        %v378 = vld [vmem:[#allocation2 + $0x8] sm:$0xff]
        %v379 = vld [vmem:[#allocation2 + $0x10] sm:$0xff]
        %v380 = vld [vmem:[#allocation2 + $0x18] sm:$0xff]
        %v381 = vld [vmem:[#allocation2 + $0x20] sm:$0xff]
        %v382 = vld [vmem:[#allocation2 + $0x28] sm:$0xff]
        %v383 = vld [vmem:[#allocation2 + $0x30] sm:$0xff]
        %v384 = vld [vmem:[#allocation2 + $0x38] sm:$0xff]
        %v385 = vld [vmem:[#allocation2 + $0x40] sm:$0xff]
        %v386 = vld [vmem:[#allocation2 + $0x48] sm:$0xff]
        %v387 = vld [vmem:[#allocation2 + $0x50] sm:$0xff]
        %v388 = vld [vmem:[#allocation2 + $0x58] sm:$0xff]
        %v389 = vld [vmem:[#allocation2 + $0x60] sm:$0xff]
        %v390 = vld [vmem:[#allocation2 + $0x68] sm:$0xff]
        %v391 = vld [vmem:[#allocation2 + $0x70] sm:$0xff]
        %v392 = vld [vmem:[#allocation2 + $0x78] sm:$0xff]
        %393 = vmatprep.subr.mxu0 0.0
        %394 = vmatpush1.msra.mxu0 %v377
        %395 = vmatprep.subr.mxu0 0.0
        %396 = vmatpush1.msra.mxu0 %v378
        %397 = vmatprep.subr.mxu0 0.0
        %398 = vmatpush1.msra.mxu0 %v379
        %399 = vmatprep.subr.mxu0 0.0
        %400 = vmatpush1.msra.mxu0 %v380
        %401 = vmatprep.subr.mxu0 0.0
        %402 = vmatpush1.msra.mxu0 %v381
        %403 = vmatprep.subr.mxu0 0.0
        %404 = vmatpush1.msra.mxu0 %v382
        %405 = vmatprep.subr.mxu0 0.0
        %406 = vmatpush1.msra.mxu0 %v383
        %407 = vmatprep.subr.mxu0 0.0
        %408 = vmatpush1.msra.mxu0 %v384
        %409 = vmatprep.subr.mxu0 0.0
        %410 = vmatpush1.msra.mxu0 %v385
        %411 = vmatprep.subr.mxu0 0.0
        %412 = vmatpush1.msra.mxu0 %v386
        %413 = vmatprep.subr.mxu0 0.0
        %414 = vmatpush1.msra.mxu0 %v387
        %415 = vmatprep.subr.mxu0 0.0
        %416 = vmatpush1.msra.mxu0 %v388
        %417 = vmatprep.subr.mxu0 0.0
        %418 = vmatpush1.msra.mxu0 %v389
        %419 = vmatprep.subr.mxu0 0.0
        %420 = vmatpush1.msra.mxu0 %v390
        %421 = vmatprep.subr.mxu0 0.0
        %422 = vmatpush1.msra.mxu0 %v391
        %423 = vmatprep.subr.mxu0 0.0
        %424 = vmatpush1.msra.mxu0 %v392
        %425 = vmatprep.subr.mxu0 0.0
        %426 = vmatpush1.msra.mxu0 0.0
        %427 = vmatprep.subr.mxu0 0.0
        %428 = vmatpush1.msra.mxu0 0.0
        %429 = vmatprep.subr.mxu0 0.0
        %430 = vmatpush1.msra.mxu0 0.0
        %431 = vmatprep.subr.mxu0 0.0
        %432 = vmatpush1.msra.mxu0 0.0
        %433 = vmatprep.subr.mxu0 0.0
        %434 = vmatpush1.msra.mxu0 0.0
        %435 = vmatprep.subr.mxu0 0.0
        %436 = vmatpush1.msra.mxu0 0.0
        %437 = vmatprep.subr.mxu0 0.0
        %438 = vmatpush1.msra.mxu0 0.0
        %439 = vmatprep.subr.mxu0 0.0
        %440 = vmatpush1.msra.mxu0 0.0
        %441 = vmatprep.subr.mxu0 0.0
        %442 = vmatpush1.msra.mxu0 0.0
        %443 = vmatprep.subr.mxu0 0.0
        %444 = vmatpush1.msra.mxu0 0.0
        %445 = vmatprep.subr.mxu0 0.0
        %446 = vmatpush1.msra.mxu0 0.0
        %447 = vmatprep.subr.mxu0 0.0
        %448 = vmatpush1.msra.mxu0 0.0
        %449 = vmatprep.subr.mxu0 0.0
        %450 = vmatpush1.msra.mxu0 0.0
        %451 = vmatprep.subr.mxu0 0.0
        %452 = vmatpush1.msra.mxu0 0.0
        %453 = vmatprep.subr.mxu0 0.0
        %454 = vmatpush1.msra.mxu0 0.0
        %455 = vmatprep.subr.mxu0 0.0
        %456 = vmatpush1.msra.mxu0 0.0
        %457 = vmatprep.mubr.f32.mxu0 0.0
        %458 = vmatmul.mubr.f32.gmra.mrb[0].mxu0 %v375
        %v459 = vpop.f32.mrb[0].mxu0
        %v460 = vadd.f32 0.0, %v459
        %v461 = vpop.f32.mrb[0].mxu0
        %462 = vmatprep.mubr.f32.mxu0 0.0
        %463 = vmatmul.mubr.f32.gmra.mrb[0].mxu0 %v376
        %v464 = vpop.f32.mrb[0].mxu0
        %v465 = vadd.f32 0.0, %v464
        %v466 = vpop.f32.mrb[0].mxu0
        %467 = vdwg.mxu0
        %v468 = vld [vmem:[#allocation5] sm:$0xff]
        %v469 = vld [vmem:[#allocation5 + $0x8] sm:$0xff]
        %v470 = vld [vmem:[#allocation5 + $0x10] sm:$0xff]
        %v471 = vld [vmem:[#allocation5 + $0x18] sm:$0xff]
        %v472 = vld [vmem:[#allocation5 + $0x20] sm:$0xff]
        %v473 = vld [vmem:[#allocation5 + $0x28] sm:$0xff]
        %v474 = vld [vmem:[#allocation5 + $0x30] sm:$0xff]
        %v475 = vld [vmem:[#allocation5 + $0x38] sm:$0xff]
        %v476 = vld [vmem:[#allocation5 + $0x40] sm:$0xff]
        %v477 = vld [vmem:[#allocation5 + $0x48] sm:$0xff]
        %v478 = vld [vmem:[#allocation5 + $0x50] sm:$0xff]
        %v479 = vld [vmem:[#allocation5 + $0x58] sm:$0xff]
        %v480 = vld [vmem:[#allocation5 + $0x60] sm:$0xff]
        %v481 = vld [vmem:[#allocation5 + $0x68] sm:$0xff]
        %v482 = vld [vmem:[#allocation5 + $0x70] sm:$0xff]
        %v483 = vld [vmem:[#allocation5 + $0x78] sm:$0xff]
        %484 = vmatprep.subr.mxu0 0.0
        %485 = vmatpush1.msra.mxu0 %v468
        %486 = vmatprep.subr.mxu0 0.0
        %487 = vmatpush1.msra.mxu0 %v469
        %488 = vmatprep.subr.mxu0 0.0
        %489 = vmatpush1.msra.mxu0 %v470
        %490 = vmatprep.subr.mxu0 0.0
        %491 = vmatpush1.msra.mxu0 %v471
        %492 = vmatprep.subr.mxu0 0.0
        %493 = vmatpush1.msra.mxu0 %v472
        %494 = vmatprep.subr.mxu0 0.0
        %495 = vmatpush1.msra.mxu0 %v473
        %496 = vmatprep.subr.mxu0 0.0
        %497 = vmatpush1.msra.mxu0 %v474
        %498 = vmatprep.subr.mxu0 0.0
        %499 = vmatpush1.msra.mxu0 %v475
        %500 = vmatprep.subr.mxu0 0.0
        %501 = vmatpush1.msra.mxu0 %v476
        %502 = vmatprep.subr.mxu0 0.0
        %503 = vmatpush1.msra.mxu0 %v477
        %504 = vmatprep.subr.mxu0 0.0
        %505 = vmatpush1.msra.mxu0 %v478
        %506 = vmatprep.subr.mxu0 0.0
        %507 = vmatpush1.msra.mxu0 %v479
        %508 = vmatprep.subr.mxu0 0.0
        %509 = vmatpush1.msra.mxu0 %v480
        %510 = vmatprep.subr.mxu0 0.0
        %511 = vmatpush1.msra.mxu0 %v481
        %512 = vmatprep.subr.mxu0 0.0
        %513 = vmatpush1.msra.mxu0 %v482
        %514 = vmatprep.subr.mxu0 0.0
        %515 = vmatpush1.msra.mxu0 %v483
        %516 = vmatprep.subr.mxu0 0.0
        %517 = vmatpush1.msra.mxu0 0.0
        %518 = vmatprep.subr.mxu0 0.0
        %519 = vmatpush1.msra.mxu0 0.0
        %520 = vmatprep.subr.mxu0 0.0
        %521 = vmatpush1.msra.mxu0 0.0
        %522 = vmatprep.subr.mxu0 0.0
        %523 = vmatpush1.msra.mxu0 0.0
        %524 = vmatprep.subr.mxu0 0.0
        %525 = vmatpush1.msra.mxu0 0.0
        %526 = vmatprep.subr.mxu0 0.0
        %527 = vmatpush1.msra.mxu0 0.0
        %528 = vmatprep.subr.mxu0 0.0
        %529 = vmatpush1.msra.mxu0 0.0
        %530 = vmatprep.subr.mxu0 0.0
        %531 = vmatpush1.msra.mxu0 0.0
        %532 = vmatprep.subr.mxu0 0.0
        %533 = vmatpush1.msra.mxu0 0.0
        %534 = vmatprep.subr.mxu0 0.0
        %535 = vmatpush1.msra.mxu0 0.0
        %536 = vmatprep.subr.mxu0 0.0
        %537 = vmatpush1.msra.mxu0 0.0
        %538 = vmatprep.subr.mxu0 0.0
        %539 = vmatpush1.msra.mxu0 0.0
        %540 = vmatprep.subr.mxu0 0.0
        %541 = vmatpush1.msra.mxu0 0.0
        %542 = vmatprep.subr.mxu0 0.0
        %543 = vmatpush1.msra.mxu0 0.0
        %544 = vmatprep.subr.mxu0 0.0
        %545 = vmatpush1.msra.mxu0 0.0
        %546 = vmatprep.subr.mxu0 0.0
        %547 = vmatpush1.msra.mxu0 0.0
        %548 = vmatprep.mubr.f32.mxu0 0.0
        %549 = vmatmul.mubr.f32.gmra.mrb[0].mxu0 %v460
        %v550 = vpop.f32.mrb[0].mxu0
        %v551 = vadd.f32 0.0, %v550
        %v552 = vpop.f32.mrb[0].mxu0
        %553 = vmatprep.mubr.f32.mxu0 0.0
        %554 = vmatmul.mubr.f32.gmra.mrb[0].mxu0 %v465
        %v555 = vpop.f32.mrb[0].mxu0
        %v556 = vadd.f32 0.0, %v555
        %v557 = vpop.f32.mrb[0].mxu0
        %558 = vdwg.mxu0
        %v559 = vmul.f32 %v551, 0.083333336
        %v560 = vmul.f32 %v556, 0.083333336
        %v561 = vld [vmem:[%s3] sm:$0x1]
        %v563 = vlaneseq
        %v564 = vshrl.u32 %v563, 7
        %v565 = vsub.s32 0, %v564
        %v566 = vrot.slane %v561, %v565
        %v568 = vadd.f32 %v559, %v566
        %v569 = vadd.f32 %v560, %v566
        %570 = vst [vmem:[%s221] sm:$0xff] %v568
        %571 = vst [vmem:[%s221 + $0x8] sm:$0xff] %v569
        %s572 = sand.u32 %s117, 1
        %s573 = scalar_lea.sflag [#allocation4], %s572
        %s574 = sand.u32 %s117, 1
        %s575 = smul.addr %s574, 16
        %s576 = scalar_lea.vmem [#allocation7], %s575
        // Predicated region
        $region45: #{tpu_custom_call.1} parent=35 // pred_check
          %p577 = pneg %p127
        $region46: #{tpu_custom_call.1} parent=35 // pred_check_branch
          %579 = sbr.rel (%p577) target = $region48
        $region47: #{tpu_custom_call.1} parent=35 // pred_region
          %s580 = smul.u32 2, %s20
          %s582 = ssub.s32 256, 256
          %583 = vsyncadd %s573, %s582
          %s584 = smul.addr %s580, 128
          %s585 = scalar_lea.hbm %s4, %s584
          %s586 = sshll.u32 %s576, 4
          %s587 = int_to_ptr.vmem [resolvable:$true] %s586
          %592 = dma.vmem_to_hbm [thread:$0]  %s587, 256, %s585, %s573, 128, 128, 8
        $region48: #{tpu_custom_call.1} parent=35 // pred_fallthru
          _
      $region36: #{tpu_custom_call.1} parent=5 // pred_fallthru
        _
      %p593 = scmp.le.s32.totalorder 2, %s15
      // Predicated region
      $region49: #{tpu_custom_call.1} parent=5 // pred_check
        %p594 = pneg %p593
      $region50: #{tpu_custom_call.1} parent=5 // pred_check_branch
        %596 = sbr.rel (%p594) target = $region52
      $region51: #{tpu_custom_call.1} parent=5 // pred_region
        %s597 = ssub.s32 %s15, 2
        // Predicated region
        $region53: #{tpu_custom_call.1} parent=51 // pred_check
          %p598 = pneg %p133
        $region54: #{tpu_custom_call.1} parent=51 // pred_check_branch
          %600 = sbr.rel (%p598) target = $region56
        $region55: #{tpu_custom_call.1} parent=51 // pred_region
          %s601 = sand.u32 %s118, 1
          %s602 = scalar_lea.sflag [#allocation4], %s601
          %s603 = sand.u32 %s118, 1
          %s604 = smul.addr %s603, 16
          %s605 = scalar_lea.vmem [#allocation7], %s604
          %606 = dma.done %s602, 256
        $region56: #{tpu_custom_call.1} parent=51 // pred_fallthru
          _
      $region52: #{tpu_custom_call.1} parent=5 // pred_fallthru
        _
    $region6: #{tpu_custom_call.1} parent=1 // loop_footer
      %s19 = sadd.s32 1, %s15
    $region7: #{tpu_custom_call.1} parent=1 // loop_footer_branch
      %14 = sbr.rel target = $region3
    $region8: #{tpu_custom_call.1} parent=1 // loop_exit
      _
    %607 = vsyncpa [#allocation3], 1
    %s608 = scalar_lea.sflag [#allocation3], 1
    %609 = vsyncpa %s608, 1
    %610 = vsyncpa [#allocation6], 1
    %611 = vsyncpa [#allocation4], 1
    %s612 = scalar_lea.sflag [#allocation4], 1
    %613 = vsyncpa %s612, 1

</llo_original>
